<compile_context>
chip_gen: v7x
topology: tpu7x:2x2x1
jax: 0.10.0
libtpu: 0.0.40
codegen_flags: <defaults>
</compile_context>

<pallas_src>
import jax
import jax.numpy as jnp
from jax.experimental import pallas as pl
from jax.experimental.pallas import tpu as pltpu


def _round_up(x, m):
    return (x + m - 1) // m * m


def _make_kernel(n_pieces):
    """Kernel closure over the (static) number of concatenated input pieces."""

    def kernel(*refs):
        x_refs = refs[:n_pieces]                              # f32 [tb, d_i]
        (w1_ref, b1_ref, w2_ref, b2_ref, w3_ref, b3_ref, o_ref) = refs[n_pieces:]

        # ---- layer 1: fused concat (never materialized in HBM), one dot ----
        if n_pieces == 1:
            xcat = x_refs[0][...]
        else:
            xcat = jnp.concatenate([r[...] for r in x_refs], axis=1)
        h1 = jnp.dot(xcat.astype(jnp.bfloat16), w1_ref[...],
                     preferred_element_type=jnp.float32)
        h1 = jnp.maximum(h1 + b1_ref[...], 0.0)               # f32 [tb, nf]

        # ---- layer 2: bf16 MXU matmul, f32 accumulate ----
        h2 = jnp.dot(h1.astype(jnp.bfloat16), w2_ref[...],
                     preferred_element_type=jnp.float32)
        h2 = jnp.maximum(h2 + b2_ref[...], 0.0)               # f32 [tb, nf]

        # ---- layer 3 (out_features = 1): VPU mul + lane reduce, not MXU ----
        logits = jnp.sum(h2 * w3_ref[...], axis=-1, keepdims=True) + b3_ref[0]
        o_ref[...] = jax.nn.sigmoid(logits)                   # f32 [tb, 1]

    return kernel


def scene_discriminator_forward(inputs, params, *, tile_b=16384):
    """inputs: list of [B, d_i] arrays (the `torch.cat(input, 1)` pieces)."""
    w1, b1, w2, b2, w3, b3 = params
    pose2, nf = int(w1.shape[0]), int(w1.shape[1])

    widths = [int(x.shape[1]) for x in inputs]
    if sum(widths) != pose2:
        # view(-1, 2*pose_dim) actually reshuffles rows -> do the glue in JAX.
        # (Requires equal batch sizes across pieces, same as torch.cat.)
        inputs = [jnp.concatenate(inputs, axis=1).reshape(-1, pose2)]
        widths = [pose2]
    n_pieces = len(inputs)
    B = int(inputs[0].shape[0])
    win = sum(widths)

    # ---- batch tile: as large as a conservative VMEM budget allows ----------
    # Per-row bytes: double-buffered f32 x blocks + in-kernel concat (f32+bf16)
    # + h1 f32 + h1 bf16 + h2 f32 + h2*w3 temp + output column.
    bytes_per_row = (2 * win * 4) + (win * 4 + win * 2) + nf * (4 + 2 + 4 + 4) + 16
    vmem_budget = 24 * 1024 * 1024
    cap_rows = max(32, vmem_budget // max(bytes_per_row, 1))
    # >= 2 grid steps whenever B allows, so v7x can shard across both TCs.
    half = _round_up(pl.cdiv(B, 2), 32)
    tb = min(tile_b, cap_rows, half)
    tb = max(32, (tb // 32) * 32)
    grid = (pl.cdiv(B, tb),)

    # Weights: bf16 for the MXU operands, f32 for VPU-side rows; tiny & resident.
    w1_bf = w1.astype(jnp.bfloat16)
    w2_bf = w2.astype(jnp.bfloat16)
    b1_row = b1.reshape(1, nf).astype(jnp.float32)
    b2_row = b2.reshape(1, nf).astype(jnp.float32)
    w3_row = w3.reshape(1, nf).astype(jnp.float32)
    b3_s = b3.reshape(1).astype(jnp.float32)        # scalar -> SMEM

    tiled = lambda i: (i, 0)     # batch-tiled arrays
    const = lambda i: (0, 0)     # weights/biases: resident across the grid

    in_specs = (
        [pl.BlockSpec((tb, d), tiled) for d in widths]            # x pieces (f32)
        + [
            pl.BlockSpec((pose2, nf), const),                     # W1
            pl.BlockSpec((1, nf), const),                         # b1
            pl.BlockSpec((nf, nf), const),                        # W2
            pl.BlockSpec((1, nf), const),                         # b2
            pl.BlockSpec((1, nf), const),                         # W3 row
            pl.BlockSpec(memory_space=pltpu.MemorySpace.SMEM),    # b3 scalar
        ]
    )

    out = pl.pallas_call(
        _make_kernel(n_pieces),
        out_shape=jax.ShapeDtypeStruct((B, 1), jnp.float32),
        grid=grid,
        in_specs=in_specs,
        out_specs=pl.BlockSpec((tb, 1), tiled),
        compiler_params=pltpu.CompilerParams(
            dimension_semantics=("parallel",),
            vmem_limit_bytes=48 * 1024 * 1024,
        ),
    )(*inputs, w1_bf, b1_row, w2_bf, b2_row, w3_row, b3_s)

    return out


def init_params(key, pose_dim, nf):
    """PyTorch Linear-style init; weights stored [in, out], biases [1, out]."""
    pose2 = pose_dim * 2
    ks = jax.random.split(key, 6)
    s1 = 1.0 / jnp.sqrt(pose2)
    s2 = 1.0 / jnp.sqrt(nf)
    w1 = jax.random.uniform(ks[0], (pose2, nf), jnp.float32, -s1, s1)
    b1 = jax.random.uniform(ks[1], (1, nf), jnp.float32, -s1, s1)
    w2 = jax.random.uniform(ks[2], (nf, nf), jnp.float32, -s2, s2)
    b2 = jax.random.uniform(ks[3], (1, nf), jnp.float32, -s2, s2)
    w3 = jax.random.uniform(ks[4], (nf, 1), jnp.float32, -s2, s2)
    b3 = jax.random.uniform(ks[5], (1, 1), jnp.float32, -s2, s2)
    return (w1, b1, w2, b2, w3, b3)


def _reference(inputs, params):
    w1, b1, w2, b2, w3, b3 = params
    x = jnp.concatenate(inputs, axis=1).reshape(-1, w1.shape[0])
    h = jnp.maximum(x @ w1 + b1, 0.0)
    h = jnp.maximum(h @ w2 + b2, 0.0)
    return jax.nn.sigmoid(h @ w3 + b3)


if __name__ == "__main__":
    pose_dim = 16          # pose_dim*2 = 32 input features
    nf = 64
    B = 2

    key = jax.random.PRNGKey(0)
    k1, k2, kp = jax.random.split(key, 3)

    # `input` in the torch module is a pair of pose tensors concatenated on dim 1
    inputs = [
        jax.random.normal(k1, (B, pose_dim), jnp.float32),
        jax.random.normal(k2, (B, pose_dim), jnp.float32),
    ]
    params = init_params(kp, pose_dim, nf)

    out = scene_discriminator_forward(inputs, params)
    out = jax.block_until_ready(out)

    ref = _reference(inputs, params)
    assert out.shape == (B, 1), out.shape
    # bf16 MXU operands -> slightly looser tolerance than pure f32
    assert jnp.allclose(out, ref, atol=2e-2, rtol=2e-2), (out, ref)

    print("KERNEL_OK")
</pallas_src>

<mosaic_0001>
module attributes {stable_mosaic.version = 11 : i64} {
  func.func @kernel(%arg0: i32, %arg1: memref<32x16xf32, #tpu.memory_space<vmem>>, %arg2: memref<32x16xf32, #tpu.memory_space<vmem>>, %arg3: memref<32x64xbf16, #tpu.memory_space<vmem>>, %arg4: memref<1x64xf32, #tpu.memory_space<vmem>>, %arg5: memref<64x64xbf16, #tpu.memory_space<vmem>>, %arg6: memref<1x64xf32, #tpu.memory_space<vmem>>, %arg7: memref<1x64xf32, #tpu.memory_space<vmem>>, %arg8: memref<1xf32, #tpu.memory_space<smem>>, %arg9: memref<32x1xf32, #tpu.memory_space<vmem>>) attributes {dimension_semantics = [#tpu.dimension_semantics<parallel>], iteration_bounds = array<i64: 1>, scalar_prefetch = 0 : i64, scratch_operands = 0 : i64, tpu.core_type = #tpu.core_type<tc>, window_params = [{transform_indices = @transform_0, window_bounds = array<i64: 32, 16>}, {transform_indices = @transform_1, window_bounds = array<i64: 32, 16>}, {pipeline_mode = #tpu.pipeline_mode<synchronous>, transform_indices = @transform_2, window_bounds = array<i64: 32, 64>}, {pipeline_mode = #tpu.pipeline_mode<synchronous>, transform_indices = @transform_3, window_bounds = array<i64: 1, 64>}, {pipeline_mode = #tpu.pipeline_mode<synchronous>, transform_indices = @transform_4, window_bounds = array<i64: 64, 64>}, {pipeline_mode = #tpu.pipeline_mode<synchronous>, transform_indices = @transform_5, window_bounds = array<i64: 1, 64>}, {pipeline_mode = #tpu.pipeline_mode<synchronous>, transform_indices = @transform_6, window_bounds = array<i64: 1, 64>}, {transform_indices = @transform_7, window_bounds = array<i64: 1>}, {transform_indices = @transform_8, window_bounds = array<i64: 32, 1>}]} {
    %c0 = arith.constant 0 : index
    %c0_0 = arith.constant 0 : index
    %0 = vector.load %arg1[%c0, %c0_0] : memref<32x16xf32, #tpu.memory_space<vmem>>, vector<32x16xf32>
    %c0_1 = arith.constant 0 : index
    %c0_2 = arith.constant 0 : index
    %1 = vector.load %arg2[%c0_1, %c0_2] : memref<32x16xf32, #tpu.memory_space<vmem>>, vector<32x16xf32>
    %2 = tpu.concatenate %0, %1 in 1 : vector<32x16xf32>, vector<32x16xf32> -> vector<32x32xf32>
    %3 = arith.truncf %2 : vector<32x32xf32> to vector<32x32xbf16>
    %c0_3 = arith.constant 0 : index
    %c0_4 = arith.constant 0 : index
    %4 = vector.load %arg3[%c0_3, %c0_4] : memref<32x64xbf16, #tpu.memory_space<vmem>>, vector<32x64xbf16>
    %cst = arith.constant dense<0.000000e+00> : vector<32x64xf32>
    %5 = tpu.matmul %3, %4, %cst {dimension_numbers = #tpu.dot_dimension_numbers<[1], [0], [0], [1], [0, 0, 1, 1], [], []>} : vector<32x32xbf16>, vector<32x64xbf16>, vector<32x64xf32> -> vector<32x64xf32>
    %c0_5 = arith.constant 0 : index
    %c0_6 = arith.constant 0 : index
    %6 = vector.load %arg4[%c0_5, %c0_6] : memref<1x64xf32, #tpu.memory_space<vmem>>, vector<1x64xf32>
    %7 = vector.broadcast %6 : vector<1x64xf32> to vector<32x64xf32>
    %8 = arith.addf %5, %7 : vector<32x64xf32>
    %cst_7 = arith.constant 0.000000e+00 : f32
    %9 = vector.broadcast %cst_7 : f32 to vector<32x64xf32>
    %10 = arith.maximumf %8, %9 : vector<32x64xf32>
    %11 = arith.truncf %10 : vector<32x64xf32> to vector<32x64xbf16>
    %c0_8 = arith.constant 0 : index
    %c0_9 = arith.constant 0 : index
    %12 = vector.load %arg5[%c0_8, %c0_9] : memref<64x64xbf16, #tpu.memory_space<vmem>>, vector<64x64xbf16>
    %cst_10 = arith.constant dense<0.000000e+00> : vector<32x64xf32>
    %13 = tpu.matmul %11, %12, %cst_10 {dimension_numbers = #tpu.dot_dimension_numbers<[1], [0], [0], [1], [0, 0, 1, 1], [], []>} : vector<32x64xbf16>, vector<64x64xbf16>, vector<32x64xf32> -> vector<32x64xf32>
    %c0_11 = arith.constant 0 : index
    %c0_12 = arith.constant 0 : index
    %14 = vector.load %arg6[%c0_11, %c0_12] : memref<1x64xf32, #tpu.memory_space<vmem>>, vector<1x64xf32>
    %15 = vector.broadcast %14 : vector<1x64xf32> to vector<32x64xf32>
    %16 = arith.addf %13, %15 : vector<32x64xf32>
    %cst_13 = arith.constant 0.000000e+00 : f32
    %17 = vector.broadcast %cst_13 : f32 to vector<32x64xf32>
    %18 = arith.maximumf %16, %17 : vector<32x64xf32>
    %c0_14 = arith.constant 0 : index
    %c0_15 = arith.constant 0 : index
    %19 = vector.load %arg7[%c0_14, %c0_15] : memref<1x64xf32, #tpu.memory_space<vmem>>, vector<1x64xf32>
    %20 = vector.broadcast %19 : vector<1x64xf32> to vector<32x64xf32>
    %21 = arith.mulf %18, %20 : vector<32x64xf32>
    %cst_16 = arith.constant dense<0.000000e+00> : vector<32xf32>
    %22 = vector.multi_reduction <add>, %21, %cst_16 [1] : vector<32x64xf32> to vector<32xf32>
    %23 = vector.shape_cast %22 : vector<32xf32> to vector<32x1xf32>
    %c0_17 = arith.constant 0 : index
    %24 = memref.load %arg8[%c0_17] : memref<1xf32, #tpu.memory_space<smem>>
    %25 = vector.broadcast %24 : f32 to vector<32x1xf32>
    %26 = arith.addf %23, %25 : vector<32x1xf32>
    %27 = arith.negf %26 : vector<32x1xf32>
    %28 = math.exp %27 : vector<32x1xf32>
    %cst_18 = arith.constant 1.000000e+00 : f32
    %29 = vector.broadcast %cst_18 : f32 to vector<32x1xf32>
    %30 = arith.addf %29, %28 : vector<32x1xf32>
    %31 = arith.divf %29, %30 : vector<32x1xf32>
    %c0_19 = arith.constant 0 : index
    %c0_20 = arith.constant 0 : index
    %32 = vector.load %arg9[%c0_19, %c0_20] : memref<32x1xf32, #tpu.memory_space<vmem>>, vector<32x1xf32>
    tpu.vector_store %arg9[%c0_19, %c0_20], %31 {strides = array<i32>} : memref<32x1xf32, #tpu.memory_space<vmem>>, vector<32x1xf32>,
    return
  }
  func.func @transform_0(%arg0: i32) -> (i32, i32) {
    %c0_i32 = arith.constant 0 : i32
    %c0_i32_0 = arith.constant 0 : i32
    return %arg0, %c0_i32 : i32, i32
  }
  func.func @transform_1(%arg0: i32) -> (i32, i32) {
    %c0_i32 = arith.constant 0 : i32
    %c0_i32_0 = arith.constant 0 : i32
    return %arg0, %c0_i32 : i32, i32
  }
  func.func @transform_2(%arg0: i32) -> (i32, i32) {
    %c0_i32 = arith.constant 0 : i32
    %c0_i32_0 = arith.constant 0 : i32
    %c0_i32_1 = arith.constant 0 : i32
    return %c0_i32, %c0_i32_0 : i32, i32
  }
  func.func @transform_3(%arg0: i32) -> (i32, i32) {
    %c0_i32 = arith.constant 0 : i32
    %c0_i32_0 = arith.constant 0 : i32
    %c0_i32_1 = arith.constant 0 : i32
    return %c0_i32, %c0_i32_0 : i32, i32
  }
  func.func @transform_4(%arg0: i32) -> (i32, i32) {
    %c0_i32 = arith.constant 0 : i32
    %c0_i32_0 = arith.constant 0 : i32
    %c0_i32_1 = arith.constant 0 : i32
    return %c0_i32, %c0_i32_0 : i32, i32
  }
  func.func @transform_5(%arg0: i32) -> (i32, i32) {
    %c0_i32 = arith.constant 0 : i32
    %c0_i32_0 = arith.constant 0 : i32
    %c0_i32_1 = arith.constant 0 : i32
    return %c0_i32, %c0_i32_0 : i32, i32
  }
  func.func @transform_6(%arg0: i32) -> (i32, i32) {
    %c0_i32 = arith.constant 0 : i32
    %c0_i32_0 = arith.constant 0 : i32
    %c0_i32_1 = arith.constant 0 : i32
    return %c0_i32, %c0_i32_0 : i32, i32
  }
  func.func @transform_7(%arg0: i32) -> i32 {
    %c0_i32 = arith.constant 0 : i32
    %c0_i32_0 = arith.constant 0 : i32
    return %c0_i32 : i32
  }
  func.func @transform_8(%arg0: i32) -> (i32, i32) {
    %c0_i32 = arith.constant 0 : i32
    %c0_i32_0 = arith.constant 0 : i32
    return %arg0, %c0_i32 : i32, i32
  }
}

</mosaic_0001>

<llo_original>
// kernel: tpu_custom_call.1
$region0: #{tpu_custom_call.1}
  #allocation0 [shape = 'u32[]', space=smem, size = 0x4, offset = 0x4, fixed_abs, tag = 'smem constant byte address 0x4 - core index']
  #allocation1 [shape = 'u32[144,128]{1,0:T(1,128)}', space=vmem, size = 0x12000, scoped, tag = 'internal scratch']
  #allocation2 [shape = 'f32[1]{0:T(128)S(6)}', space=smem, size = 0x200, scoped, tag = 'scoped memory for tpu_custom_call.1']
  %s0 = inlined_call_operand.vmem [shape: f32[2,16], index: 0, kind: input, shape index: {}]
  %s1 = inlined_call_operand.vmem [shape: f32[2,16], index: 1, kind: input, shape index: {}]
  %s2 = inlined_call_operand.hbm [shape: bf16[32,64], index: 2, kind: input, shape index: {}]
  %s3 = inlined_call_operand.vmem [shape: f32[1,64], index: 3, kind: input, shape index: {}]
  %s4 = inlined_call_operand.hbm [shape: bf16[64,64], index: 4, kind: input, shape index: {}]
  %s5 = inlined_call_operand.vmem [shape: f32[1,64], index: 5, kind: input, shape index: {}]
  %s6 = inlined_call_operand.vmem [shape: f32[1,64], index: 6, kind: input, shape index: {}]
  %s7 = inlined_call_operand.<no memory space> [shape: f32[1], index: 7, kind: input, shape index: {}]
  %s8 = inlined_call_operand.vmem [shape: f32[2,1], index: 8, kind: output, shape index: {}]
  %s9 = sld [smem:[#allocation0]]
  $region80: #{tpu_custom_call.1} parent=0
    _
  %s11 = ssub.s32 1, %s9
  %s12 = scalar_select 0, %s11, %s9
  %13 = sst [smem:[#allocation2]] %s7
  $region1: #{tpu_custom_call.1} parent=0
    #allocation3 [shape = 'u8[8192]{0}', space=vmem, size = 0x2000, scoped, tag = 'input window, operand 2, single buffered']
    #allocation4 [shape = 's32[1]{0}', space=sflag, size = 0x4, scoped, tag = 'scoped memory for tpu_custom_call.1']
    #allocation5 [shape = 'u8[16384]{0}', space=vmem, size = 0x4000, scoped, tag = 'input window, operand 4, single buffered']
    #allocation6 [shape = 's32[1]{0}', space=sflag, size = 0x4, scoped, tag = 'scoped memory for tpu_custom_call.1']
    #allocation7 [shape = 'u8[16384]{0}', space=vmem, size = 0x4000, scoped, tag = 'output window, operand 0, single buffered']
    %14 = vsyncpa [#allocation4], 0
    %15 = vsyncpa [#allocation6], 0
    // Predicated region
    $region2: #{tpu_custom_call.1} parent=1 // pred_check
      _
    $region3: #{tpu_custom_call.1} parent=1 // pred_check_branch
      %17 = sbr.rel (0) target = $region5
    $region4: #{tpu_custom_call.1} parent=1 // pred_region
      _
    $region5: #{tpu_custom_call.1} parent=1 // pred_fallthru
      _
    // Predicated region
    $region6: #{tpu_custom_call.1} parent=1 // pred_check
      _
    $region7: #{tpu_custom_call.1} parent=1 // pred_check_branch
      %19 = sbr.rel (0) target = $region9
    $region8: #{tpu_custom_call.1} parent=1 // pred_region
      _
    $region9: #{tpu_custom_call.1} parent=1 // pred_fallthru
      _
    // Predicated region
    $region10: #{tpu_custom_call.1} parent=1 // pred_check
      _
    $region11: #{tpu_custom_call.1} parent=1 // pred_check_branch
      %21 = sbr.rel (0) target = $region13
    $region12: #{tpu_custom_call.1} parent=1 // pred_region
      %s23 = ssub.s32 256, 256
      %24 = vsyncadd [#allocation4], %s23
      %s25 = sshll.u32 [#allocation3], 4
      %s26 = int_to_ptr.vmem [resolvable:$true] %s25
      %31 = dma.hbm_to_vmem [thread:$0]  %s2, 256, %s26, [#allocation4], 64, 64, 4
    $region13: #{tpu_custom_call.1} parent=1 // pred_fallthru
      _
    // Predicated region
    $region14: #{tpu_custom_call.1} parent=1 // pred_check
      _
    $region15: #{tpu_custom_call.1} parent=1 // pred_check_branch
      %33 = sbr.rel (0) target = $region17
    $region16: #{tpu_custom_call.1} parent=1 // pred_region
      _
    $region17: #{tpu_custom_call.1} parent=1 // pred_fallthru
      _
    // Predicated region
    $region18: #{tpu_custom_call.1} parent=1 // pred_check
      _
    $region19: #{tpu_custom_call.1} parent=1 // pred_check_branch
      %35 = sbr.rel (0) target = $region21
    $region20: #{tpu_custom_call.1} parent=1 // pred_region
      %s37 = ssub.s32 512, 512
      %38 = vsyncadd [#allocation6], %s37
      %s39 = sshll.u32 [#allocation5], 4
      %s40 = int_to_ptr.vmem [resolvable:$true] %s39
      %45 = dma.hbm_to_vmem [thread:$0]  %s4, 512, %s40, [#allocation6], 64, 64, 4
    $region21: #{tpu_custom_call.1} parent=1 // pred_fallthru
      _
    // Predicated region
    $region22: #{tpu_custom_call.1} parent=1 // pred_check
      _
    $region23: #{tpu_custom_call.1} parent=1 // pred_check_branch
      %47 = sbr.rel (0) target = $region25
    $region24: #{tpu_custom_call.1} parent=1 // pred_region
      _
    $region25: #{tpu_custom_call.1} parent=1 // pred_fallthru
      _
    // Predicated region
    $region26: #{tpu_custom_call.1} parent=1 // pred_check
      _
    $region27: #{tpu_custom_call.1} parent=1 // pred_check_branch
      %49 = sbr.rel (0) target = $region29
    $region28: #{tpu_custom_call.1} parent=1 // pred_region
      _
    $region29: #{tpu_custom_call.1} parent=1 // pred_fallthru
      _
    // Predicated region
    $region30: #{tpu_custom_call.1} parent=1 // pred_check
      _
    $region31: #{tpu_custom_call.1} parent=1 // pred_check_branch
      %51 = sbr.rel (0) target = $region33
    $region32: #{tpu_custom_call.1} parent=1 // pred_region
      _
    $region33: #{tpu_custom_call.1} parent=1 // pred_fallthru
      _
    // Predicated region
    $region34: #{tpu_custom_call.1} parent=1 // pred_check
      _
    $region35: #{tpu_custom_call.1} parent=1 // pred_check_branch
      %53 = sbr.rel (0) target = $region37
    $region36: #{tpu_custom_call.1} parent=1 // pred_region
      %54 = dma.done [#allocation4], 256
    $region37: #{tpu_custom_call.1} parent=1 // pred_fallthru
      _
    // Predicated region
    $region38: #{tpu_custom_call.1} parent=1 // pred_check
      _
    $region39: #{tpu_custom_call.1} parent=1 // pred_check_branch
      %56 = sbr.rel (0) target = $region41
    $region40: #{tpu_custom_call.1} parent=1 // pred_region
      %57 = dma.done [#allocation6], 512
    $region41: #{tpu_custom_call.1} parent=1 // pred_fallthru
      _
    %v59 = vld [vmem:[%s0] sm:$0xff]
    %v60 = vld [vmem:[%s0 + $0x8] sm:$0xff]
    %v61 = vld [vmem:[%s0 + $0x10] sm:$0xff]
    %v62 = vld [vmem:[%s0 + $0x18] sm:$0xff]
    %v63 = vld [vmem:[%s1] sm:$0xff]
    %v64 = vld [vmem:[%s1 + $0x8] sm:$0xff]
    %v65 = vld [vmem:[%s1 + $0x10] sm:$0xff]
    %v66 = vld [vmem:[%s1 + $0x18] sm:$0xff]
    %71 = vrot.lane.b32.xlu0 %v63, 16
    %v72 = vpop.permute.xlu0 %71
    %73 = vrot.lane.b32.xlu0 %v64, 16
    %v74 = vpop.permute.xlu0 %73
    %75 = vrot.lane.b32.xlu0 %v65, 16
    %v76 = vpop.permute.xlu0 %75
    %77 = vrot.lane.b32.xlu0 %v66, 16
    %v78 = vpop.permute.xlu0 %77
    %vm83 = vcmask 130048
    %v84 = vsel %vm83, %v59, %v72
    %v85 = vsel %vm83, %v60, %v74
    %v86 = vsel %vm83, %v61, %v76
    %v87 = vsel %vm83, %v62, %v78
    %v88 = vpack.c.bf16 %v85, %v84
    %v89 = vpack.c.bf16 %v87, %v86
    %v90 = vld [vmem:[#allocation3] sm:$0xf]
    %v91 = vld [vmem:[#allocation3 + $0x4] sm:$0xf]
    %v92 = vld [vmem:[#allocation3 + $0x8] sm:$0xf]
    %v93 = vld [vmem:[#allocation3 + $0xc] sm:$0xf]
    %v94 = vld [vmem:[%s3] sm:$0x1]
    %v96 = vlaneseq
    %v97 = vshrl.u32 %v96, 7
    %v98 = vsub.s32 0, %v97
    %v99 = vrot.slane %v94, %v98
    %v105 = vunpack.c.l.b16 %v90
    %v106 = vunpack.c.l.b16 %v91
    %v107 = vunpack.c.l.b16 %v92
    %v108 = vunpack.c.l.b16 %v93
    %v109 = vpack.c.b16 %v106, %v105
    %v110 = vpack.c.b16 %v108, %v107
    %vm113 = vcmask 261120
    %v115 = vsel %vm113, %v88, 0
    %v118 = vsel %vm113, %v89, 0
    %120 = vmatprep.subr.bf16.mxu0 0
    %121 = vmatpush1.bf16.msra.mxu0 %v109
    %122 = vmatprep.subr.bf16.mxu0 0
    %123 = vmatpush1.bf16.msra.mxu0 %v110
    %124 = vmatprep.subr.bf16.mxu0 0
    %125 = vmatpush1.bf16.msra.mxu0 0
    %126 = vmatprep.subr.bf16.mxu0 0
    %127 = vmatpush1.bf16.msra.mxu0 0
    %128 = vmatprep.subr.bf16.mxu0 0
    %129 = vmatpush1.bf16.msra.mxu0 0
    %130 = vmatprep.subr.bf16.mxu0 0
    %131 = vmatpush1.bf16.msra.mxu0 0
    %132 = vmatprep.subr.bf16.mxu0 0
    %133 = vmatpush1.bf16.msra.mxu0 0
    %134 = vmatprep.subr.bf16.mxu0 0
    %135 = vmatpush1.bf16.msra.mxu0 0
    %136 = vmatprep.subr.bf16.mxu0 0
    %137 = vmatpush1.bf16.msra.mxu0 0
    %138 = vmatprep.subr.bf16.mxu0 0
    %139 = vmatpush1.bf16.msra.mxu0 0
    %140 = vmatprep.subr.bf16.mxu0 0
    %141 = vmatpush1.bf16.msra.mxu0 0
    %142 = vmatprep.subr.bf16.mxu0 0
    %143 = vmatpush1.bf16.msra.mxu0 0
    %144 = vmatprep.subr.bf16.mxu0 0
    %145 = vmatpush1.bf16.msra.mxu0 0
    %146 = vmatprep.subr.bf16.mxu0 0
    %147 = vmatpush1.bf16.msra.mxu0 0
    %148 = vmatprep.subr.bf16.mxu0 0
    %149 = vmatpush1.bf16.msra.mxu0 0
    %150 = vmatprep.subr.bf16.mxu0 0
    %151 = vmatpush1.bf16.msra.mxu0 0
    %152 = vmatprep.mubr.bf16.mxu0 0
    %153 = vmatmul.mubr.bf16.gmra.mrb[0].mxu0 %v115
    %v154 = vpop.f32.mrb[0].mxu0
    %v155 = vadd.f32 %v99, %v154
    %v156 = vpop.f32.mrb[0].mxu0
    %v157 = vpop.f32.mrb[0].mxu0
    %v158 = vadd.f32 %v99, %v157
    %v159 = vpop.f32.mrb[0].mxu0
    %160 = vmatprep.mubr.bf16.mxu0 0
    %161 = vmatmul.mubr.bf16.gmra.mrb[0].mxu0 %v118
    %v162 = vpop.f32.mrb[0].mxu0
    %v163 = vadd.f32 %v99, %v162
    %v164 = vpop.f32.mrb[0].mxu0
    %v165 = vpop.f32.mrb[0].mxu0
    %v166 = vadd.f32 %v99, %v165
    %v167 = vpop.f32.mrb[0].mxu0
    %168 = vdwg.mxu0
    %v169 = vmax.f32 %v155, 0.0
    %v170 = vmax.f32 %v158, 0.0
    %v171 = vmax.f32 %v163, 0.0
    %v172 = vmax.f32 %v166, 0.0
    %v173 = vpack.c.bf16 %v170, %v169
    %v174 = vpack.c.bf16 %v172, %v171
    %v175 = vld [vmem:[#allocation5] sm:$0xf]
    %v176 = vld [vmem:[#allocation5 + $0x4] sm:$0xf]
    %v177 = vld [vmem:[#allocation5 + $0x8] sm:$0xf]
    %v178 = vld [vmem:[#allocation5 + $0xc] sm:$0xf]
    %v179 = vld [vmem:[#allocation5 + $0x10] sm:$0xf]
    %v180 = vld [vmem:[#allocation5 + $0x14] sm:$0xf]
    %v181 = vld [vmem:[#allocation5 + $0x18] sm:$0xf]
    %v182 = vld [vmem:[#allocation5 + $0x1c] sm:$0xf]
    %v183 = vld [vmem:[%s5] sm:$0x1]
    %v185 = vlaneseq
    %v186 = vshrl.u32 %v185, 7
    %v187 = vsub.s32 0, %v186
    %v188 = vrot.slane %v183, %v187
    %v198 = vunpack.c.l.b16 %v175
    %v199 = vunpack.c.l.b16 %v176
    %v200 = vunpack.c.l.b16 %v177
    %v201 = vunpack.c.l.b16 %v178
    %v202 = vunpack.c.l.b16 %v179
    %v203 = vunpack.c.l.b16 %v180
    %v204 = vunpack.c.l.b16 %v181
    %v205 = vunpack.c.l.b16 %v182
    %v206 = vpack.c.b16 %v199, %v198
    %v207 = vpack.c.b16 %v201, %v200
    %v208 = vpack.c.b16 %v203, %v202
    %v209 = vpack.c.b16 %v205, %v204
    %vm214 = vcmask 523264
    %v216 = vsel %vm214, %v173, 0
    %v219 = vsel %vm214, %v174, 0
    %221 = vmatprep.subr.bf16.mxu0 0
    %222 = vmatpush1.bf16.msra.mxu0 %v206
    %223 = vmatprep.subr.bf16.mxu0 0
    %224 = vmatpush1.bf16.msra.mxu0 %v207
    %225 = vmatprep.subr.bf16.mxu0 0
    %226 = vmatpush1.bf16.msra.mxu0 %v208
    %227 = vmatprep.subr.bf16.mxu0 0
    %228 = vmatpush1.bf16.msra.mxu0 %v209
    %229 = vmatprep.subr.bf16.mxu0 0
    %230 = vmatpush1.bf16.msra.mxu0 0
    %231 = vmatprep.subr.bf16.mxu0 0
    %232 = vmatpush1.bf16.msra.mxu0 0
    %233 = vmatprep.subr.bf16.mxu0 0
    %234 = vmatpush1.bf16.msra.mxu0 0
    %235 = vmatprep.subr.bf16.mxu0 0
    %236 = vmatpush1.bf16.msra.mxu0 0
    %237 = vmatprep.subr.bf16.mxu0 0
    %238 = vmatpush1.bf16.msra.mxu0 0
    %239 = vmatprep.subr.bf16.mxu0 0
    %240 = vmatpush1.bf16.msra.mxu0 0
    %241 = vmatprep.subr.bf16.mxu0 0
    %242 = vmatpush1.bf16.msra.mxu0 0
    %243 = vmatprep.subr.bf16.mxu0 0
    %244 = vmatpush1.bf16.msra.mxu0 0
    %245 = vmatprep.subr.bf16.mxu0 0
    %246 = vmatpush1.bf16.msra.mxu0 0
    %247 = vmatprep.subr.bf16.mxu0 0
    %248 = vmatpush1.bf16.msra.mxu0 0
    %249 = vmatprep.subr.bf16.mxu0 0
    %250 = vmatpush1.bf16.msra.mxu0 0
    %251 = vmatprep.subr.bf16.mxu0 0
    %252 = vmatpush1.bf16.msra.mxu0 0
    %253 = vmatprep.mubr.bf16.mxu0 0
    %254 = vmatmul.mubr.bf16.gmra.mrb[0].mxu0 %v216
    %v255 = vpop.f32.mrb[0].mxu0
    %v256 = vadd.f32 %v188, %v255
    %v257 = vpop.f32.mrb[0].mxu0
    %v258 = vpop.f32.mrb[0].mxu0
    %v259 = vadd.f32 %v188, %v258
    %v260 = vpop.f32.mrb[0].mxu0
    %261 = vmatprep.mubr.bf16.mxu0 0
    %262 = vmatmul.mubr.bf16.gmra.mrb[0].mxu0 %v219
    %v263 = vpop.f32.mrb[0].mxu0
    %v264 = vadd.f32 %v188, %v263
    %v265 = vpop.f32.mrb[0].mxu0
    %v266 = vpop.f32.mrb[0].mxu0
    %v267 = vadd.f32 %v188, %v266
    %v268 = vpop.f32.mrb[0].mxu0
    %269 = vdwg.mxu0
    %v270 = vmax.f32 %v256, 0.0
    %v271 = vmax.f32 %v259, 0.0
    %v272 = vmax.f32 %v264, 0.0
    %v273 = vmax.f32 %v267, 0.0
    %v274 = vld [vmem:[%s6] sm:$0x1]
    %v276 = vlaneseq
    %v277 = vshrl.u32 %v276, 7
    %v278 = vsub.s32 0, %v277
    %v279 = vrot.slane %v274, %v278
    %v281 = vmul.f32 %v270, %v279
    %v282 = vmul.f32 %v271, %v279
    %v283 = vmul.f32 %v272, %v279
    %v284 = vmul.f32 %v273, %v279
    %v285 = vsel %vm214, %v281, 0.0
    %286 = vadd.xlane.f32.xlu0 %v285
    %v287 = vpop.xlane.xlu0 %286
    %v288 = vsel %vm214, %v282, 0.0
    %289 = vadd.xlane.f32.xlu0 %v288
    %v290 = vpop.xlane.xlu0 %289
    %v291 = vsel %vm214, %v283, 0.0
    %292 = vadd.xlane.f32.xlu0 %v291
    %v293 = vpop.xlane.xlu0 %292
    %v294 = vsel %vm214, %v284, 0.0
    %295 = vadd.xlane.f32.xlu0 %v294
    %v296 = vpop.xlane.xlu0 %295
    %s297 = sld [smem:[#allocation2]]
    %v298 = vstv %s297
    %v299 = vadd.f32 %v287, %v298
    %v300 = vadd.f32 %v290, %v298
    %v301 = vadd.f32 %v293, %v298
    %v302 = vadd.f32 %v296, %v298
    %v303 = vxor.u32 %v299, 2147483648
    %v304 = vxor.u32 %v300, 2147483648
    %v305 = vxor.u32 %v301, 2147483648
    %v306 = vxor.u32 %v302, 2147483648
    %v307 = vmul.f32 %v303, 1.442695
    %v308 = vpow.pop %v307
    %v309 = vmul.f32 %v304, 1.442695
    %v310 = vpow.pop %v309
    %v311 = vmul.f32 %v305, 1.442695
    %v312 = vpow.pop %v311
    %v313 = vmul.f32 %v306, 1.442695
    %v314 = vpow.pop %v313
    %v315 = vadd.f32 %v308, 1.0
    %v316 = vadd.f32 %v310, 1.0
    %v317 = vadd.f32 %v312, 1.0
    %v318 = vadd.f32 %v314, 1.0
    %v319 = vrcp.pop %v315
    %v320 = vmul.f32 1.0, %v319
    %v321 = vrcp.pop %v316
    %v322 = vmul.f32 1.0, %v321
    %v323 = vrcp.pop %v317
    %v324 = vmul.f32 1.0, %v323
    %v325 = vrcp.pop %v318
    %v326 = vmul.f32 1.0, %v325
    %vm327 = vcmask 7168
    %328 = vst.msk [vmem:[#allocation7] sm:$0xff] %vm327, %v320
    %329 = vst.msk [vmem:[#allocation7 + $0x8] sm:$0xff] %vm327, %v322
    %330 = vst.msk [vmem:[#allocation7 + $0x10] sm:$0xff] %vm327, %v324
    %331 = vst.msk [vmem:[#allocation7 + $0x18] sm:$0xff] %vm327, %v326
    // Predicated region
    $region42: #{tpu_custom_call.1} parent=1 // pred_check
      _
    $region43: #{tpu_custom_call.1} parent=1 // pred_check_branch
      %333 = sbr.rel (0) target = $region45
    $region44: #{tpu_custom_call.1} parent=1 // pred_region
      // Predicated region
      $region46: #{tpu_custom_call.1} parent=44 // pred_check
        _
      $region47: #{tpu_custom_call.1} parent=44 // pred_check_branch
        %335 = sbr.rel (0) target = $region49
      $region48: #{tpu_custom_call.1} parent=44 // pred_region
        // Predicated region
        $region50: #{tpu_custom_call.1} parent=48 // pred_check
          _
        $region51: #{tpu_custom_call.1} parent=48 // pred_check_branch
          %337 = sbr.rel target = $region53
        $region52: #{tpu_custom_call.1} parent=48 // pred_region
          // Predicated region
          $region65: #{tpu_custom_call.1} parent=52 // pred_check
            _
          $region66: #{tpu_custom_call.1} parent=52 // pred_check_branch
            %352 = sbr.rel (0) target = $region68
          $region67: #{tpu_custom_call.1} parent=52 // pred_region
            loop: start=0, step=1, limit=1
            $region69: #{tpu_custom_call.1} parent=67 // loop_pre_header
              _
            $region70: #{tpu_custom_call.1} parent=67 // loop_header
              %s355 = sphi 0, %s359
              %p356 = scmp.ge.s32.totalorder %s355, 1
              %s360 = sphi [#allocation7], [#allocation7]
              %s361 = sphi %s8, %s8
            $region71: #{tpu_custom_call.1} parent=67 // loop_header_branch
              %358 = sbr.rel (%p356) target = $region75
            $region72: #{tpu_custom_call.1} parent=67 // loop_body
              %v362 = vld [vmem:[%s360] sm:$0x3]
              %363 = vst [vmem:[%s361] sm:$0x3] %v362
            $region73: #{tpu_custom_call.1} parent=67 // loop_footer
              %s359 = sadd.s32 1, %s355
            $region74: #{tpu_custom_call.1} parent=67 // loop_footer_branch
              %354 = sbr.rel target = $region70
            $region75: #{tpu_custom_call.1} parent=67 // loop_exit
              _
          $region68: #{tpu_custom_call.1} parent=52 // pred_fallthru
            _
        $region53: #{tpu_custom_call.1} parent=48 // pred_fallthru
          _
        // Predicated region
        $region54: #{tpu_custom_call.1} parent=48 // pred_check
          _
        $region55: #{tpu_custom_call.1} parent=48 // pred_check_branch
          %339 = sbr.rel (0) target = $region57
        $region56: #{tpu_custom_call.1} parent=48 // pred_region
          loop: start=0, step=1, limit=1
          $region58: #{tpu_custom_call.1} parent=56 // loop_pre_header
            _
          $region59: #{tpu_custom_call.1} parent=56 // loop_header
            %s342 = sphi 0, %s346
            %p343 = scmp.ge.s32.totalorder %s342, 1
            %s347 = sphi [#allocation7], [#allocation7]
            %s348 = sphi %s8, %s8
          $region60: #{tpu_custom_call.1} parent=56 // loop_header_branch
            %345 = sbr.rel (%p343) target = $region64
          $region61: #{tpu_custom_call.1} parent=56 // loop_body
            %v349 = vld [vmem:[%s347] sm:$0x3]
            %350 = vst [vmem:[%s348] sm:$0x3] %v349
          $region62: #{tpu_custom_call.1} parent=56 // loop_footer
            %s346 = sadd.s32 1, %s342
          $region63: #{tpu_custom_call.1} parent=56 // loop_footer_branch
            %341 = sbr.rel target = $region59
          $region64: #{tpu_custom_call.1} parent=56 // loop_exit
            _
        $region57: #{tpu_custom_call.1} parent=48 // pred_fallthru
          _
      $region49: #{tpu_custom_call.1} parent=44 // pred_fallthru
        _
      %364 = vnop
    $region45: #{tpu_custom_call.1} parent=1 // pred_fallthru
      _
    // Predicated region
    $region76: #{tpu_custom_call.1} parent=1 // pred_check
      _
    $region77: #{tpu_custom_call.1} parent=1 // pred_check_branch
      %366 = sbr.rel (0) target = $region79
    $region78: #{tpu_custom_call.1} parent=1 // pred_region
      _
    $region79: #{tpu_custom_call.1} parent=1 // pred_fallthru
      _
    %367 = vsyncpa [#allocation4], 1
    %368 = vsyncpa [#allocation6], 1

</llo_original>
